<compile_context>
chip_gen: v5e
topology: v5e:2x2
jax: 0.10.0
libtpu: 0.0.40
codegen_flags: <defaults>
</compile_context>

<pallas_src>
import jax
import jax.numpy as jnp
from jax.experimental import pallas as pl
from jax.experimental.pallas import tpu as pltpu

# ---------------- config (synthetic, mirrors config.settings) ----------------
BB = 4              # settings['bb']         : backbone input channels
BB_OUT = 32         # settings['bb_output']  : backbone output features
HID = BB_OUT // 2   # ForwardLayer hidden width
F_DIMS = 16         # settings['F_dims']
NUM_SRC = 2         # len(settings['src_datasets'])
NUM_C = 10          # settings['num_C'][src_datasets[0]]
SC = NUM_SRC * NUM_C
H = W = 16          # spatial
N = 2               # batch


def _round_up(x, m):
    return (x + m - 1) // m * m


# --- packed f32 parameter buffer layout (all row offsets 8-sublane aligned) ---
R_W1 = 0                              # w1^T : (HID, BB_OUT)
R_W2 = _round_up(R_W1 + HID, 8)       # w2^T : (F_DIMS, HID)
R_WC = _round_up(R_W2 + F_DIMS, 8)    # wc^T : (SC, F_DIMS)
R_BB = _round_up(R_WC + SC, 8)        # bb^T : (BB_OUT, 1)
R_B1 = _round_up(R_BB + BB_OUT, 8)    # b1^T : (HID, 1)
R_B2 = _round_up(R_B1 + HID, 8)       # b2^T : (F_DIMS, 1)
R_BC = _round_up(R_B2 + F_DIMS, 8)    # bc^T : (SC, 1)
P_ROWS = _round_up(R_BC + SC, 8)      # = 144
P_COLS = BB_OUT                       # widest packed row (w1^T)


# ------------------------------- Pallas kernel --------------------------------
def multisource_kernel(xT_ref, wconv_ref, poolT_ref, p_ref, out_ref):
    # --- B: fused 3x3 conv (pad=1) as ONE K=36 bf16 MXU matmul (transposed) ---
    # xT: (9*BB, rows) bf16 im2col patches^T; wconv: (BB_OUT, 9*BB) bf16.
    convT = jnp.dot(wconv_ref[...], xT_ref[...],
                    preferred_element_type=jnp.float32)      # (BB_OUT, rows) f32
    bbT = p_ref[R_BB:R_BB + BB_OUT, 0:1]                     # (BB_OUT, 1)
    convT = jnp.maximum(convT + bbT, 0.0)                    # lane-dense bias+ReLU

    # --- global average pool (per-sample row selection) as one MXU matmul ---
    featT = jnp.dot(convT, poolT_ref[...],
                    preferred_element_type=jnp.float32)      # (BB_OUT, n)

    # --- F: forward MLP (kept transposed; all f32 on the VPU) ---
    w1T = p_ref[R_W1:R_W1 + HID, 0:BB_OUT]
    b1T = p_ref[R_B1:R_B1 + HID, 0:1]
    hT = jnp.maximum(
        jnp.dot(w1T, featT, preferred_element_type=jnp.float32) + b1T, 0.0)
    w2T = p_ref[R_W2:R_W2 + F_DIMS, 0:HID]
    b2T = p_ref[R_B2:R_B2 + F_DIMS, 0:1]
    fT = jnp.maximum(
        jnp.dot(w2T, hT, preferred_element_type=jnp.float32) + b2T, 0.0)

    # --- C: all source classifiers fused into one matmul + one store ---
    wcT = p_ref[R_WC:R_WC + SC, 0:F_DIMS]
    bcT = p_ref[R_BC:R_BC + SC, 0:1]
    out_ref[...] = jnp.dot(wcT, fT, preferred_element_type=jnp.float32) + bcT


# ------------------------------- JAX wrapper ----------------------------------
def pack_params(params):
    """One-time staging: conv weight as a bf16 MXU operand; everything else in
    ONE contiguous f32 buffer sliced with static views inside the kernel."""
    wconv = params["wb"].T.astype(jnp.bfloat16)                  # (BB_OUT, 9*BB)
    wc2d = jnp.transpose(params["wc"], (0, 2, 1)).reshape(SC, F_DIMS)
    buf = jnp.zeros((P_ROWS, P_COLS), jnp.float32)
    buf = buf.at[R_W1:R_W1 + HID, :BB_OUT].set(params["w1"].T)
    buf = buf.at[R_W2:R_W2 + F_DIMS, :HID].set(params["w2"].T)
    buf = buf.at[R_WC:R_WC + SC, :F_DIMS].set(wc2d)
    buf = buf.at[R_BB:R_BB + BB_OUT, 0:1].set(params["bb"].T)
    buf = buf.at[R_B1:R_B1 + HID, 0:1].set(params["b1"].T)
    buf = buf.at[R_B2:R_B2 + F_DIMS, 0:1].set(params["b2"].T)
    buf = buf.at[R_BC:R_BC + SC, 0:1].set(params["bc"].reshape(SC, 1))
    return {"wconv": wconv, "params": buf}


@jax.jit
def multisource_forward(x_nchw, packed):
    # TODO(synk): the repo's custom train-loop forward is unspecified; for large
    # training batches add a leading "parallel" grid axis over 512-1024-row
    # blocks of the im2col matrix (BlockSpec pipelining hides the DMAs and
    # v7x's second TensorCore gets used). At n=2 one un-gridded call is fastest.
    n, c, h, w = x_nchw.shape
    rows = n * h * w

    # im2col (taps on lanes) then transpose so conv rows sit on the lane axis.
    x_nhwc = jnp.transpose(x_nchw, (0, 2, 3, 1))
    xp = jnp.pad(x_nhwc, ((0, 0), (1, 1), (1, 1), (0, 0)))
    cols = [xp[:, ky:ky + h, kx:kx + w, :] for ky in range(3) for kx in range(3)]
    patches = jnp.concatenate(cols, axis=-1).reshape(rows, 9 * c)
    xT = patches.T.astype(jnp.bfloat16)                          # (9*C, rows)

    # pooling matrix derived from the ACTUAL batch size (selects each sample's
    # contiguous H*W conv rows and averages them).
    poolT = (jnp.arange(rows)[:, None] // (h * w)
             == jnp.arange(n)[None, :]).astype(jnp.float32) / (h * w)   # (rows, n)

    flops = (2 * rows * (BB_OUT * 9 * c + BB_OUT * n)
             + 2 * n * (HID * BB_OUT + F_DIMS * HID + SC * F_DIMS))
    bytes_accessed = (xT.size * 2 + packed["wconv"].size * 2
                      + poolT.size * 4 + packed["params"].size * 4 + SC * n * 4)

    vmem = pl.BlockSpec(memory_space=pltpu.MemorySpace.VMEM)
    outT = pl.pallas_call(
        multisource_kernel,
        out_shape=jax.ShapeDtypeStruct((SC, n), jnp.float32),
        in_specs=[vmem] * 4,
        out_specs=vmem,
        cost_estimate=pl.CostEstimate(flops=flops, transcendentals=0,
                                      bytes_accessed=bytes_accessed),
    )(xT, packed["wconv"], poolT, packed["params"])
    # (S*NUM_C, n) -> (S, n, NUM_C)
    return jnp.transpose(outT.T.reshape(n, NUM_SRC, NUM_C), (1, 0, 2))


# ---------------------------- pure-JAX f32 reference ---------------------------
def im2col_3x3(x_nhwc):
    n, h, w, c = x_nhwc.shape
    xp = jnp.pad(x_nhwc, ((0, 0), (1, 1), (1, 1), (0, 0)))
    cols = [xp[:, ky:ky + h, kx:kx + w, :] for ky in range(3) for kx in range(3)]
    return jnp.concatenate(cols, axis=-1).reshape(n * h * w, 9 * c)


def reference_forward(x_nchw, params):
    n = x_nchw.shape[0]
    x_nhwc = jnp.transpose(x_nchw, (0, 2, 3, 1))
    patches = im2col_3x3(x_nhwc)
    conv = jnp.maximum(patches @ params["wb"] + params["bb"], 0.0)
    feat = conv.reshape(n, H * W, BB_OUT).mean(axis=1)
    hdn = jnp.maximum(feat @ params["w1"] + params["b1"], 0.0)
    f = jnp.maximum(hdn @ params["w2"] + params["b2"], 0.0)
    return jnp.einsum("nf,sfc->snc", f, params["wc"]) + params["bc"]


def init_params(key):
    ks = jax.random.split(key, 5)
    def lin(k, fan_in, shape):
        return (jax.random.normal(k, shape, jnp.float32)
                / jnp.sqrt(fan_in)).astype(jnp.float32)
    return {
        # B: conv weight stored pre-reshaped for im2col, rows ordered (ky,kx,c)
        "wb": lin(ks[0], 9 * BB, (9 * BB, BB_OUT)),
        "bb": jnp.zeros((1, BB_OUT), jnp.float32),
        # F: Linear(BB_OUT -> BB_OUT//2), Linear(BB_OUT//2 -> F_DIMS)
        "w1": lin(ks[1], BB_OUT, (BB_OUT, HID)),
        "b1": jnp.zeros((1, HID), jnp.float32),
        "w2": lin(ks[2], HID, (HID, F_DIMS)),
        "b2": jnp.zeros((1, F_DIMS), jnp.float32),
        # C: per-source classifiers
        "wc": lin(ks[3], F_DIMS, (NUM_SRC, F_DIMS, NUM_C)),
        "bc": 0.01 * jax.random.normal(ks[4], (NUM_SRC, 1, NUM_C), jnp.float32),
    }


if __name__ == "__main__":
    key = jax.random.PRNGKey(0)
    k_x, k_p = jax.random.split(key)
    x = jax.random.normal(k_x, (N, BB, H, W), jnp.float32)       # NCHW, like PyTorch
    params = init_params(k_p)
    packed = pack_params(params)

    out = jax.block_until_ready(multisource_forward(x, packed))
    ref = reference_forward(x, params)

    assert out.shape == (NUM_SRC, N, NUM_C), out.shape
    # Kernel uses bf16 conv operands with f32 MXU accumulation; the 256-pixel
    # average pool shrinks the conv rounding error ~16x, so 5e-3 is generous
    # while remaining a meaningful check against the pure-f32 reference.
    assert jnp.allclose(out, ref, atol=5e-3, rtol=5e-3), "mismatch vs reference"
    print("KERNEL_OK")
</pallas_src>

<mosaic_0001>
module attributes {stable_mosaic.version = 11 : i64} {
  func.func @multisource_kernel(%arg0: memref<36x512xbf16, #tpu.memory_space<vmem>>, %arg1: memref<32x36xbf16, #tpu.memory_space<vmem>>, %arg2: memref<512x2xf32, #tpu.memory_space<vmem>>, %arg3: memref<144x32xf32, #tpu.memory_space<vmem>>, %arg4: memref<20x2xf32, #tpu.memory_space<vmem>>) attributes {dimension_semantics = [], scalar_prefetch = 0 : i64, scratch_operands = 0 : i64, tpu.core_type = #tpu.core_type<tc>} {
    %c0 = arith.constant 0 : index
    %c0_0 = arith.constant 0 : index
    %0 = vector.load %arg1[%c0, %c0_0] : memref<32x36xbf16, #tpu.memory_space<vmem>>, vector<32x36xbf16>
    %c0_1 = arith.constant 0 : index
    %c0_2 = arith.constant 0 : index
    %1 = vector.load %arg0[%c0_1, %c0_2] : memref<36x512xbf16, #tpu.memory_space<vmem>>, vector<36x512xbf16>
    %cst = arith.constant dense<0.000000e+00> : vector<32x512xf32>
    %2 = tpu.matmul %0, %1, %cst {dimension_numbers = #tpu.dot_dimension_numbers<[1], [0], [0], [1], [0, 0, 1, 1], [], []>} : vector<32x36xbf16>, vector<36x512xbf16>, vector<32x512xf32> -> vector<32x512xf32>
    %c56 = arith.constant 56 : index
    %c0_3 = arith.constant 0 : index
    %3 = vector.load %arg3[%c56, %c0_3] : memref<144x32xf32, #tpu.memory_space<vmem>>, vector<32x1xf32>
    %4 = vector.broadcast %3 : vector<32x1xf32> to vector<32x512xf32>
    %5 = arith.addf %2, %4 : vector<32x512xf32>
    %cst_4 = arith.constant 0.000000e+00 : f32
    %6 = vector.broadcast %cst_4 : f32 to vector<32x512xf32>
    %7 = arith.maximumf %5, %6 : vector<32x512xf32>
    %c0_5 = arith.constant 0 : index
    %c0_6 = arith.constant 0 : index
    %8 = vector.load %arg2[%c0_5, %c0_6] : memref<512x2xf32, #tpu.memory_space<vmem>>, vector<512x2xf32>
    %cst_7 = arith.constant dense<0.000000e+00> : vector<32x2xf32>
    %9 = tpu.matmul %7, %8, %cst_7 {dimension_numbers = #tpu.dot_dimension_numbers<[1], [0], [0], [1], [0, 0, 1, 1], [], []>} : vector<32x512xf32>, vector<512x2xf32>, vector<32x2xf32> -> vector<32x2xf32>
    %c0_8 = arith.constant 0 : index
    %c0_9 = arith.constant 0 : index
    %10 = vector.load %arg3[%c0_8, %c0_9] : memref<144x32xf32, #tpu.memory_space<vmem>>, vector<16x32xf32>
    %c88 = arith.constant 88 : index
    %c0_10 = arith.constant 0 : index
    %11 = vector.load %arg3[%c88, %c0_10] : memref<144x32xf32, #tpu.memory_space<vmem>>, vector<16x1xf32>
    %cst_11 = arith.constant dense<0.000000e+00> : vector<16x2xf32>
    %12 = tpu.matmul %10, %9, %cst_11 {dimension_numbers = #tpu.dot_dimension_numbers<[1], [0], [0], [1], [0, 0, 1, 1], [], []>} : vector<16x32xf32>, vector<32x2xf32>, vector<16x2xf32> -> vector<16x2xf32>
    %13 = vector.broadcast %11 : vector<16x1xf32> to vector<16x2xf32>
    %14 = arith.addf %12, %13 : vector<16x2xf32>
    %cst_12 = arith.constant 0.000000e+00 : f32
    %15 = vector.broadcast %cst_12 : f32 to vector<16x2xf32>
    %16 = arith.maximumf %14, %15 : vector<16x2xf32>
    %c16 = arith.constant 16 : index
    %c0_13 = arith.constant 0 : index
    %17 = vector.load %arg3[%c16, %c0_13] : memref<144x32xf32, #tpu.memory_space<vmem>>, vector<16x16xf32>
    %c104 = arith.constant 104 : index
    %c0_14 = arith.constant 0 : index
    %18 = vector.load %arg3[%c104, %c0_14] : memref<144x32xf32, #tpu.memory_space<vmem>>, vector<16x1xf32>
    %cst_15 = arith.constant dense<0.000000e+00> : vector<16x2xf32>
    %19 = tpu.matmul %17, %16, %cst_15 {dimension_numbers = #tpu.dot_dimension_numbers<[1], [0], [0], [1], [0, 0, 1, 1], [], []>} : vector<16x16xf32>, vector<16x2xf32>, vector<16x2xf32> -> vector<16x2xf32>
    %20 = vector.broadcast %18 : vector<16x1xf32> to vector<16x2xf32>
    %21 = arith.addf %19, %20 : vector<16x2xf32>
    %cst_16 = arith.constant 0.000000e+00 : f32
    %22 = vector.broadcast %cst_16 : f32 to vector<16x2xf32>
    %23 = arith.maximumf %21, %22 : vector<16x2xf32>
    %c32 = arith.constant 32 : index
    %c0_17 = arith.constant 0 : index
    %24 = vector.load %arg3[%c32, %c0_17] : memref<144x32xf32, #tpu.memory_space<vmem>>, vector<20x16xf32>
    %c120 = arith.constant 120 : index
    %c0_18 = arith.constant 0 : index
    %25 = vector.load %arg3[%c120, %c0_18] : memref<144x32xf32, #tpu.memory_space<vmem>>, vector<20x1xf32>
    %cst_19 = arith.constant dense<0.000000e+00> : vector<20x2xf32>
    %26 = tpu.matmul %24, %23, %cst_19 {dimension_numbers = #tpu.dot_dimension_numbers<[1], [0], [0], [1], [0, 0, 1, 1], [], []>} : vector<20x16xf32>, vector<16x2xf32>, vector<20x2xf32> -> vector<20x2xf32>
    %27 = vector.broadcast %25 : vector<20x1xf32> to vector<20x2xf32>
    %28 = arith.addf %26, %27 : vector<20x2xf32>
    %c0_20 = arith.constant 0 : index
    %c0_21 = arith.constant 0 : index
    %29 = vector.load %arg4[%c0_20, %c0_21] : memref<20x2xf32, #tpu.memory_space<vmem>>, vector<20x2xf32>
    tpu.vector_store %arg4[%c0_20, %c0_21], %28 {strides = array<i32>} : memref<20x2xf32, #tpu.memory_space<vmem>>, vector<20x2xf32>,
    return
  }
}

</mosaic_0001>

<llo_original>
// kernel: multisource_forward.1
$region0: #{multisource_forward.1}
  #allocation0 [shape = 'u32[]', space=smem, size = 0x4, offset = 0x4, fixed_abs, tag = 'smem constant byte address 0x4 - core index']
  #allocation1 [shape = 'u32[72,128]{1,0:T(1,128)}', space=vmem, size = 0x9000, scoped, tag = 'internal scratch']
  %s0 = inlined_call_operand.vmem [shape: bf16[36,512], index: 0, kind: input, shape index: {}]
  %s1 = inlined_call_operand.vmem [shape: bf16[32,36], index: 1, kind: input, shape index: {}]
  %s2 = inlined_call_operand.vmem [shape: f32[512,2], index: 2, kind: input, shape index: {}]
  %s3 = inlined_call_operand.vmem [shape: f32[144,32], index: 3, kind: input, shape index: {}]
  %s4 = inlined_call_operand.vmem [shape: f32[20,2], index: 4, kind: output, shape index: {}]
  %s5 = sld [smem:[#allocation0]]
  $region26: #{multisource_forward.1} parent=0
    _
  %s7 = ssub.s32 1, %s5
  %s8 = scalar_select 0, %s7, %s5
  // Predicated region
  $region2: #{multisource_forward.1} parent=0 // pred_check
    _
  $region3: #{multisource_forward.1} parent=0 // pred_check_branch
    %10 = sbr.rel (0) target = $region5
  $region4: #{multisource_forward.1} parent=0 // pred_region
    _
  $region5: #{multisource_forward.1} parent=0 // pred_fallthru
    _
  // Predicated region
  $region6: #{multisource_forward.1} parent=0 // pred_check
    _
  $region7: #{multisource_forward.1} parent=0 // pred_check_branch
    %12 = sbr.rel (0) target = $region9
  $region8: #{multisource_forward.1} parent=0 // pred_region
    _
  $region9: #{multisource_forward.1} parent=0 // pred_fallthru
    _
  // Predicated region
  $region10: #{multisource_forward.1} parent=0 // pred_check
    _
  $region11: #{multisource_forward.1} parent=0 // pred_check_branch
    %14 = sbr.rel (0) target = $region13
  $region12: #{multisource_forward.1} parent=0 // pred_region
    _
  $region13: #{multisource_forward.1} parent=0 // pred_fallthru
    _
  // Predicated region
  $region14: #{multisource_forward.1} parent=0 // pred_check
    _
  $region15: #{multisource_forward.1} parent=0 // pred_check_branch
    %16 = sbr.rel (0) target = $region17
  $region16: #{multisource_forward.1} parent=0 // pred_region
    _
  $region17: #{multisource_forward.1} parent=0 // pred_fallthru
    _
  %v18 = vld [vmem:[%s1] sm:$0xf]
  %v19 = vld [vmem:[%s1 + $0x4] sm:$0xf]
  %v20 = vld [vmem:[%s1 + $0x8] sm:$0xf]
  %v21 = vld [vmem:[%s1 + $0xc] sm:$0xf]
  %v22 = vld [vmem:[%s0] sm:$0xff]
  %v23 = vld [vmem:[%s0 + $0x8] sm:$0xff]
  %v24 = vld [vmem:[%s0 + $0x10] sm:$0xff]
  %v25 = vld [vmem:[%s0 + $0x18] sm:$0xff]
  %v26 = vld [vmem:[%s0 + $0x20] sm:$0xff]
  %v27 = vld [vmem:[%s0 + $0x28] sm:$0xff]
  %v28 = vld [vmem:[%s0 + $0x30] sm:$0xff]
  %v29 = vld [vmem:[%s0 + $0x38] sm:$0xff]
  %v30 = vld [vmem:[%s0 + $0x40] sm:$0x33]
  %v31 = vld [vmem:[%s0 + $0x48] sm:$0x33]
  %v32 = vld [vmem:[%s3 + $0x38] sm:$0xff]
  %v33 = vld [vmem:[%s3 + $0x40] sm:$0xff]
  %v34 = vld [vmem:[%s3 + $0x48] sm:$0xff]
  %v35 = vld [vmem:[%s3 + $0x50] sm:$0xff]
  %37 = vset.pattern.permute.xlu0 0
  %38 = vperm.xlu0 %37, %v32
  %v39 = vpop.permute.xlu0 %38
  %42 = vset.pattern.permute.xlu0 0
  %43 = vperm.xlu0 %42, %v33
  %v44 = vpop.permute.xlu0 %43
  %47 = vset.pattern.permute.xlu0 0
  %48 = vperm.xlu0 %47, %v34
  %v49 = vpop.permute.xlu0 %48
  %52 = vset.pattern.permute.xlu0 0
  %53 = vperm.xlu0 %52, %v35
  %v54 = vpop.permute.xlu0 %53
  %v60 = vunpack.c.l.b16 %v18
  %v61 = vunpack.c.l.b16 %v19
  %v62 = vunpack.c.l.b16 %v20
  %v63 = vunpack.c.l.b16 %v21
  %v64 = vpack.c.b16 %v61, %v60
  %v65 = vpack.c.b16 %v63, %v62
  %v76 = vunpack.c.l.b16 %v22
  %v77 = vunpack.c.h.b16 %v22
  %v78 = vunpack.c.l.b16 %v23
  %v79 = vunpack.c.h.b16 %v23
  %v80 = vunpack.c.l.b16 %v24
  %v81 = vunpack.c.h.b16 %v24
  %v82 = vunpack.c.l.b16 %v25
  %v83 = vunpack.c.h.b16 %v25
  %v84 = vunpack.c.l.b16 %v26
  %v85 = vunpack.c.h.b16 %v26
  %v86 = vunpack.c.l.b16 %v27
  %v87 = vunpack.c.h.b16 %v27
  %v88 = vunpack.c.l.b16 %v28
  %v89 = vunpack.c.h.b16 %v28
  %v90 = vunpack.c.l.b16 %v29
  %v91 = vunpack.c.h.b16 %v29
  %v92 = vunpack.c.l.b16 %v30
  %v93 = vunpack.c.h.b16 %v30
  %v94 = vunpack.c.l.b16 %v31
  %v95 = vunpack.c.h.b16 %v31
  %v96 = vpack.c.b16 %v80, %v76
  %v97 = vpack.c.b16 %v81, %v77
  %v98 = vpack.c.b16 %v82, %v78
  %v99 = vpack.c.b16 %v83, %v79
  %v100 = vpack.c.b16 %v88, %v84
  %v101 = vpack.c.b16 %v89, %v85
  %v102 = vpack.c.b16 %v90, %v86
  %v103 = vpack.c.b16 %v91, %v87
  %v104 = vpack.c.b16 %v92, %v92
  %v105 = vpack.c.b16 %v93, %v93
  %v106 = vpack.c.b16 %v94, %v94
  %v107 = vpack.c.b16 %v95, %v95
  %vm116 = vcmask 293888
  %v118 = vsel %vm116, %v64, 0
  %v121 = vsel %vm116, %v65, 0
  %vm123 = vcmask 1041408
  %v125 = vsel %vm123, %v104, 0
  %v128 = vsel %vm123, %v105, 0
  %v131 = vsel %vm123, %v106, 0
  %v134 = vsel %vm123, %v107, 0
  %136 = vmatpush.bf16.msra.mxu0 0
  %137 = vmatpush.bf16.msra.mxu0 0
  %138 = vmatpush.bf16.msra.mxu0 0
  %139 = vmatpush.bf16.msra.mxu0 0
  %140 = vmatpush.bf16.msra.mxu0 0
  %141 = vmatpush.bf16.msra.mxu0 %v125
  %142 = vmatpush.bf16.msra.mxu0 %v100
  %143 = vmatpush.bf16.msra.mxu0 %v96
  %144 = vmatmul.bf16.gmra.mxu0 %v118
  %v145 = vpop.f32.mrf.mxu0
  %v146 = vadd.f32 %v39, %v145
  %v147 = vpop.f32.mrf.mxu0
  %v148 = vadd.f32 %v44, %v147
  %149 = vmatmul.bf16.gmra.mxu0 %v121
  %v150 = vpop.f32.mrf.mxu0
  %v151 = vadd.f32 %v49, %v150
  %v152 = vpop.f32.mrf.mxu0
  %v153 = vadd.f32 %v54, %v152
  %154 = vdwg.mxu0
  %155 = vmatpush.bf16.msra.mxu0 0
  %156 = vmatpush.bf16.msra.mxu0 0
  %157 = vmatpush.bf16.msra.mxu0 0
  %158 = vmatpush.bf16.msra.mxu0 0
  %159 = vmatpush.bf16.msra.mxu0 0
  %160 = vmatpush.bf16.msra.mxu0 %v128
  %161 = vmatpush.bf16.msra.mxu0 %v101
  %162 = vmatpush.bf16.msra.mxu0 %v97
  %163 = vmatmul.bf16.gmra.mxu0 %v118
  %v164 = vpop.f32.mrf.mxu0
  %v165 = vadd.f32 %v39, %v164
  %v166 = vpop.f32.mrf.mxu0
  %v167 = vadd.f32 %v44, %v166
  %168 = vmatmul.bf16.gmra.mxu0 %v121
  %v169 = vpop.f32.mrf.mxu0
  %v170 = vadd.f32 %v49, %v169
  %v171 = vpop.f32.mrf.mxu0
  %v172 = vadd.f32 %v54, %v171
  %173 = vdwg.mxu0
  %174 = vmatpush.bf16.msra.mxu0 0
  %175 = vmatpush.bf16.msra.mxu0 0
  %176 = vmatpush.bf16.msra.mxu0 0
  %177 = vmatpush.bf16.msra.mxu0 0
  %178 = vmatpush.bf16.msra.mxu0 0
  %179 = vmatpush.bf16.msra.mxu0 %v131
  %180 = vmatpush.bf16.msra.mxu0 %v102
  %181 = vmatpush.bf16.msra.mxu0 %v98
  %182 = vmatmul.bf16.gmra.mxu0 %v118
  %v183 = vpop.f32.mrf.mxu0
  %v184 = vadd.f32 %v39, %v183
  %v185 = vpop.f32.mrf.mxu0
  %v186 = vadd.f32 %v44, %v185
  %187 = vmatmul.bf16.gmra.mxu0 %v121
  %v188 = vpop.f32.mrf.mxu0
  %v189 = vadd.f32 %v49, %v188
  %v190 = vpop.f32.mrf.mxu0
  %v191 = vadd.f32 %v54, %v190
  %192 = vdwg.mxu0
  %193 = vmatpush.bf16.msra.mxu0 0
  %194 = vmatpush.bf16.msra.mxu0 0
  %195 = vmatpush.bf16.msra.mxu0 0
  %196 = vmatpush.bf16.msra.mxu0 0
  %197 = vmatpush.bf16.msra.mxu0 0
  %198 = vmatpush.bf16.msra.mxu0 %v134
  %199 = vmatpush.bf16.msra.mxu0 %v103
  %200 = vmatpush.bf16.msra.mxu0 %v99
  %201 = vmatmul.bf16.gmra.mxu0 %v118
  %v202 = vpop.f32.mrf.mxu0
  %v203 = vadd.f32 %v39, %v202
  %v204 = vpop.f32.mrf.mxu0
  %v205 = vadd.f32 %v44, %v204
  %206 = vmatmul.bf16.gmra.mxu0 %v121
  %v207 = vpop.f32.mrf.mxu0
  %v208 = vadd.f32 %v49, %v207
  %v209 = vpop.f32.mrf.mxu0
  %v210 = vadd.f32 %v54, %v209
  %211 = vdwg.mxu0
  %v212 = vmax.f32 %v146, 0.0
  %v213 = vmax.f32 %v165, 0.0
  %v214 = vmax.f32 %v184, 0.0
  %v215 = vmax.f32 %v203, 0.0
  %v216 = vmax.f32 %v148, 0.0
  %v217 = vmax.f32 %v167, 0.0
  %v218 = vmax.f32 %v186, 0.0
  %v219 = vmax.f32 %v205, 0.0
  %v220 = vmax.f32 %v151, 0.0
  %v221 = vmax.f32 %v170, 0.0
  %v222 = vmax.f32 %v189, 0.0
  %v223 = vmax.f32 %v208, 0.0
  %v224 = vmax.f32 %v153, 0.0
  %v225 = vmax.f32 %v172, 0.0
  %v226 = vmax.f32 %v191, 0.0
  %v227 = vmax.f32 %v210, 0.0
  %v228 = vld [vmem:[%s2] sm:$0xff]
  %v229 = vld [vmem:[%s2 + $0x8] sm:$0xff]
  %v230 = vld [vmem:[%s2 + $0x10] sm:$0xff]
  %v231 = vld [vmem:[%s2 + $0x18] sm:$0xff]
  %v232 = vld [vmem:[%s2 + $0x20] sm:$0xff]
  %v233 = vld [vmem:[%s2 + $0x28] sm:$0xff]
  %v234 = vld [vmem:[%s2 + $0x30] sm:$0xff]
  %v235 = vld [vmem:[%s2 + $0x38] sm:$0xff]
  %v236 = vld [vmem:[%s2 + $0x40] sm:$0xff]
  %v237 = vld [vmem:[%s2 + $0x48] sm:$0xff]
  %v238 = vld [vmem:[%s2 + $0x50] sm:$0xff]
  %v239 = vld [vmem:[%s2 + $0x58] sm:$0xff]
  %v240 = vld [vmem:[%s2 + $0x60] sm:$0xff]
  %v241 = vld [vmem:[%s2 + $0x68] sm:$0xff]
  %v242 = vld [vmem:[%s2 + $0x70] sm:$0xff]
  %v243 = vld [vmem:[%s2 + $0x78] sm:$0xff]
  %v244 = vld [vmem:[%s2 + $0x80] sm:$0xff]
  %v245 = vld [vmem:[%s2 + $0x88] sm:$0xff]
  %v246 = vld [vmem:[%s2 + $0x90] sm:$0xff]
  %v247 = vld [vmem:[%s2 + $0x98] sm:$0xff]
  %v248 = vld [vmem:[%s2 + $0xa0] sm:$0xff]
  %v249 = vld [vmem:[%s2 + $0xa8] sm:$0xff]
  %v250 = vld [vmem:[%s2 + $0xb0] sm:$0xff]
  %v251 = vld [vmem:[%s2 + $0xb8] sm:$0xff]
  %v252 = vld [vmem:[%s2 + $0xc0] sm:$0xff]
  %v253 = vld [vmem:[%s2 + $0xc8] sm:$0xff]
  %v254 = vld [vmem:[%s2 + $0xd0] sm:$0xff]
  %v255 = vld [vmem:[%s2 + $0xd8] sm:$0xff]
  %v256 = vld [vmem:[%s2 + $0xe0] sm:$0xff]
  %v257 = vld [vmem:[%s2 + $0xe8] sm:$0xff]
  %v258 = vld [vmem:[%s2 + $0xf0] sm:$0xff]
  %v259 = vld [vmem:[%s2 + $0xf8] sm:$0xff]
  %v260 = vld [vmem:[%s2 + $0x100] sm:$0xff]
  %v261 = vld [vmem:[%s2 + $0x108] sm:$0xff]
  %v262 = vld [vmem:[%s2 + $0x110] sm:$0xff]
  %v263 = vld [vmem:[%s2 + $0x118] sm:$0xff]
  %v264 = vld [vmem:[%s2 + $0x120] sm:$0xff]
  %v265 = vld [vmem:[%s2 + $0x128] sm:$0xff]
  %v266 = vld [vmem:[%s2 + $0x130] sm:$0xff]
  %v267 = vld [vmem:[%s2 + $0x138] sm:$0xff]
  %v268 = vld [vmem:[%s2 + $0x140] sm:$0xff]
  %v269 = vld [vmem:[%s2 + $0x148] sm:$0xff]
  %v270 = vld [vmem:[%s2 + $0x150] sm:$0xff]
  %v271 = vld [vmem:[%s2 + $0x158] sm:$0xff]
  %v272 = vld [vmem:[%s2 + $0x160] sm:$0xff]
  %v273 = vld [vmem:[%s2 + $0x168] sm:$0xff]
  %v274 = vld [vmem:[%s2 + $0x170] sm:$0xff]
  %v275 = vld [vmem:[%s2 + $0x178] sm:$0xff]
  %v276 = vld [vmem:[%s2 + $0x180] sm:$0xff]
  %v277 = vld [vmem:[%s2 + $0x188] sm:$0xff]
  %v278 = vld [vmem:[%s2 + $0x190] sm:$0xff]
  %v279 = vld [vmem:[%s2 + $0x198] sm:$0xff]
  %v280 = vld [vmem:[%s2 + $0x1a0] sm:$0xff]
  %v281 = vld [vmem:[%s2 + $0x1a8] sm:$0xff]
  %v282 = vld [vmem:[%s2 + $0x1b0] sm:$0xff]
  %v283 = vld [vmem:[%s2 + $0x1b8] sm:$0xff]
  %v284 = vld [vmem:[%s2 + $0x1c0] sm:$0xff]
  %v285 = vld [vmem:[%s2 + $0x1c8] sm:$0xff]
  %v286 = vld [vmem:[%s2 + $0x1d0] sm:$0xff]
  %v287 = vld [vmem:[%s2 + $0x1d8] sm:$0xff]
  %v288 = vld [vmem:[%s2 + $0x1e0] sm:$0xff]
  %v289 = vld [vmem:[%s2 + $0x1e8] sm:$0xff]
  %v290 = vld [vmem:[%s2 + $0x1f0] sm:$0xff]
  %v291 = vld [vmem:[%s2 + $0x1f8] sm:$0xff]
  %292 = vmatpush.msra.mxu0 %v243
  %293 = vmatpush.msra.mxu0 %v242
  %294 = vmatpush.msra.mxu0 %v241
  %295 = vmatpush.msra.mxu0 %v240
  %296 = vmatpush.msra.mxu0 %v239
  %297 = vmatpush.msra.mxu0 %v238
  %298 = vmatpush.msra.mxu0 %v237
  %299 = vmatpush.msra.mxu0 %v236
  %300 = vmatpush.msra.mxu0 %v235
  %301 = vmatpush.msra.mxu0 %v234
  %302 = vmatpush.msra.mxu0 %v233
  %303 = vmatpush.msra.mxu0 %v232
  %304 = vmatpush.msra.mxu0 %v231
  %305 = vmatpush.msra.mxu0 %v230
  %306 = vmatpush.msra.mxu0 %v229
  %307 = vmatpush.msra.mxu0 %v228
  %308 = vmatmul.f32.gmra.mxu0 %v212
  %v309 = vpop.f32.mrf.mxu0
  %v310 = vadd.f32 0.0, %v309
  %311 = vmatmul.f32.gmra.mxu0 %v216
  %v312 = vpop.f32.mrf.mxu0
  %v313 = vadd.f32 0.0, %v312
  %314 = vmatmul.f32.gmra.mxu0 %v220
  %v315 = vpop.f32.mrf.mxu0
  %v316 = vadd.f32 0.0, %v315
  %317 = vmatmul.f32.gmra.mxu0 %v224
  %v318 = vpop.f32.mrf.mxu0
  %v319 = vadd.f32 0.0, %v318
  %320 = vdwg.mxu0
  %321 = vmatpush.msra.mxu0 %v259
  %322 = vmatpush.msra.mxu0 %v258
  %323 = vmatpush.msra.mxu0 %v257
  %324 = vmatpush.msra.mxu0 %v256
  %325 = vmatpush.msra.mxu0 %v255
  %326 = vmatpush.msra.mxu0 %v254
  %327 = vmatpush.msra.mxu0 %v253
  %328 = vmatpush.msra.mxu0 %v252
  %329 = vmatpush.msra.mxu0 %v251
  %330 = vmatpush.msra.mxu0 %v250
  %331 = vmatpush.msra.mxu0 %v249
  %332 = vmatpush.msra.mxu0 %v248
  %333 = vmatpush.msra.mxu0 %v247
  %334 = vmatpush.msra.mxu0 %v246
  %335 = vmatpush.msra.mxu0 %v245
  %336 = vmatpush.msra.mxu0 %v244
  %337 = vmatmul.f32.gmra.mxu0 %v213
  %v338 = vpop.f32.mrf.mxu0
  %v339 = vadd.f32 %v310, %v338
  %340 = vmatmul.f32.gmra.mxu0 %v217
  %v341 = vpop.f32.mrf.mxu0
  %v342 = vadd.f32 %v313, %v341
  %343 = vmatmul.f32.gmra.mxu0 %v221
  %v344 = vpop.f32.mrf.mxu0
  %v345 = vadd.f32 %v316, %v344
  %346 = vmatmul.f32.gmra.mxu0 %v225
  %v347 = vpop.f32.mrf.mxu0
  %v348 = vadd.f32 %v319, %v347
  %349 = vdwg.mxu0
  %350 = vmatpush.msra.mxu0 %v275
  %351 = vmatpush.msra.mxu0 %v274
  %352 = vmatpush.msra.mxu0 %v273
  %353 = vmatpush.msra.mxu0 %v272
  %354 = vmatpush.msra.mxu0 %v271
  %355 = vmatpush.msra.mxu0 %v270
  %356 = vmatpush.msra.mxu0 %v269
  %357 = vmatpush.msra.mxu0 %v268
  %358 = vmatpush.msra.mxu0 %v267
  %359 = vmatpush.msra.mxu0 %v266
  %360 = vmatpush.msra.mxu0 %v265
  %361 = vmatpush.msra.mxu0 %v264
  %362 = vmatpush.msra.mxu0 %v263
  %363 = vmatpush.msra.mxu0 %v262
  %364 = vmatpush.msra.mxu0 %v261
  %365 = vmatpush.msra.mxu0 %v260
  %366 = vmatmul.f32.gmra.mxu0 %v214
  %v367 = vpop.f32.mrf.mxu0
  %v368 = vadd.f32 %v339, %v367
  %369 = vmatmul.f32.gmra.mxu0 %v218
  %v370 = vpop.f32.mrf.mxu0
  %v371 = vadd.f32 %v342, %v370
  %372 = vmatmul.f32.gmra.mxu0 %v222
  %v373 = vpop.f32.mrf.mxu0
  %v374 = vadd.f32 %v345, %v373
  %375 = vmatmul.f32.gmra.mxu0 %v226
  %v376 = vpop.f32.mrf.mxu0
  %v377 = vadd.f32 %v348, %v376
  %378 = vdwg.mxu0
  %379 = vmatpush.msra.mxu0 %v291
  %380 = vmatpush.msra.mxu0 %v290
  %381 = vmatpush.msra.mxu0 %v289
  %382 = vmatpush.msra.mxu0 %v288
  %383 = vmatpush.msra.mxu0 %v287
  %384 = vmatpush.msra.mxu0 %v286
  %385 = vmatpush.msra.mxu0 %v285
  %386 = vmatpush.msra.mxu0 %v284
  %387 = vmatpush.msra.mxu0 %v283
  %388 = vmatpush.msra.mxu0 %v282
  %389 = vmatpush.msra.mxu0 %v281
  %390 = vmatpush.msra.mxu0 %v280
  %391 = vmatpush.msra.mxu0 %v279
  %392 = vmatpush.msra.mxu0 %v278
  %393 = vmatpush.msra.mxu0 %v277
  %394 = vmatpush.msra.mxu0 %v276
  %395 = vmatmul.f32.gmra.mxu0 %v215
  %v396 = vpop.f32.mrf.mxu0
  %v397 = vadd.f32 %v368, %v396
  %398 = vmatmul.f32.gmra.mxu0 %v219
  %v399 = vpop.f32.mrf.mxu0
  %v400 = vadd.f32 %v371, %v399
  %401 = vmatmul.f32.gmra.mxu0 %v223
  %v402 = vpop.f32.mrf.mxu0
  %v403 = vadd.f32 %v374, %v402
  %404 = vmatmul.f32.gmra.mxu0 %v227
  %v405 = vpop.f32.mrf.mxu0
  %v406 = vadd.f32 %v377, %v405
  %407 = vdwg.mxu0
  %v408 = vld [vmem:[%s3] sm:$0xff]
  %v409 = vld [vmem:[%s3 + $0x8] sm:$0xff]
  %v410 = vld [vmem:[%s3 + $0x58] sm:$0xff]
  %v411 = vld [vmem:[%s3 + $0x60] sm:$0xff]
  %413 = vset.pattern.permute.xlu0 0
  %414 = vperm.xlu0 %413, %v410
  %v415 = vpop.permute.xlu0 %414
  %418 = vset.pattern.permute.xlu0 0
  %419 = vperm.xlu0 %418, %v411
  %v420 = vpop.permute.xlu0 %419
  %vm422 = vcmask 261120
  %v424 = vsel %vm422, %v408, 0
  %v427 = vsel %vm422, %v409, 0
  %429 = vmatpush.msra.mxu0 0.0
  %430 = vmatpush.msra.mxu0 0.0
  %431 = vmatpush.msra.mxu0 0.0
  %432 = vmatpush.msra.mxu0 0.0
  %433 = vmatpush.msra.mxu0 0.0
  %434 = vmatpush.msra.mxu0 0.0
  %435 = vmatpush.msra.mxu0 0.0
  %436 = vmatpush.msra.mxu0 0.0
  %437 = vmatpush.msra.mxu0 0.0
  %438 = vmatpush.msra.mxu0 0.0
  %439 = vmatpush.msra.mxu0 0.0
  %440 = vmatpush.msra.mxu0 0.0
  %441 = vmatpush.msra.mxu0 %v406
  %442 = vmatpush.msra.mxu0 %v403
  %443 = vmatpush.msra.mxu0 %v400
  %444 = vmatpush.msra.mxu0 %v397
  %445 = vmatmul.f32.gmra.mxu0 %v424
  %v446 = vpop.f32.mrf.mxu0
  %v447 = vadd.f32 %v415, %v446
  %448 = vmatmul.f32.gmra.mxu0 %v427
  %v449 = vpop.f32.mrf.mxu0
  %v450 = vadd.f32 %v420, %v449
  %451 = vdwg.mxu0
  %v452 = vmax.f32 %v447, 0.0
  %v453 = vmax.f32 %v450, 0.0
  %v454 = vld [vmem:[%s3 + $0x10] sm:$0xff]
  %v455 = vld [vmem:[%s3 + $0x18] sm:$0xff]
  %v456 = vld [vmem:[%s3 + $0x68] sm:$0xff]
  %v457 = vld [vmem:[%s3 + $0x70] sm:$0xff]
  %459 = vset.pattern.permute.xlu0 0
  %460 = vperm.xlu0 %459, %v456
  %v461 = vpop.permute.xlu0 %460
  %464 = vset.pattern.permute.xlu0 0
  %465 = vperm.xlu0 %464, %v457
  %v466 = vpop.permute.xlu0 %465
  %vm468 = vcmask 130048
  %v470 = vsel %vm468, %v454, 0
  %v473 = vsel %vm468, %v455, 0
  %475 = vmatpush.msra.mxu0 0.0
  %476 = vmatpush.msra.mxu0 0.0
  %477 = vmatpush.msra.mxu0 0.0
  %478 = vmatpush.msra.mxu0 0.0
  %479 = vmatpush.msra.mxu0 0.0
  %480 = vmatpush.msra.mxu0 0.0
  %481 = vmatpush.msra.mxu0 0.0
  %482 = vmatpush.msra.mxu0 0.0
  %483 = vmatpush.msra.mxu0 0.0
  %484 = vmatpush.msra.mxu0 0.0
  %485 = vmatpush.msra.mxu0 0.0
  %486 = vmatpush.msra.mxu0 0.0
  %487 = vmatpush.msra.mxu0 0.0
  %488 = vmatpush.msra.mxu0 0.0
  %489 = vmatpush.msra.mxu0 %v453
  %490 = vmatpush.msra.mxu0 %v452
  %491 = vmatmul.f32.gmra.mxu0 %v470
  %v492 = vpop.f32.mrf.mxu0
  %v493 = vadd.f32 %v461, %v492
  %494 = vmatmul.f32.gmra.mxu0 %v473
  %v495 = vpop.f32.mrf.mxu0
  %v496 = vadd.f32 %v466, %v495
  %497 = vdwg.mxu0
  %v498 = vmax.f32 %v493, 0.0
  %v499 = vmax.f32 %v496, 0.0
  %v500 = vld [vmem:[%s3 + $0x20] sm:$0xff]
  %v501 = vld [vmem:[%s3 + $0x28] sm:$0xff]
  %v502 = vld [vmem:[%s3 + $0x30] sm:$0xf]
  %v503 = vld [vmem:[%s3 + $0x78] sm:$0xff]
  %v504 = vld [vmem:[%s3 + $0x80] sm:$0xff]
  %v505 = vld [vmem:[%s3 + $0x88] sm:$0xf]
  %507 = vset.pattern.permute.xlu0 0
  %508 = vperm.xlu0 %507, %v503
  %v509 = vpop.permute.xlu0 %508
  %512 = vset.pattern.permute.xlu0 0
  %513 = vperm.xlu0 %512, %v504
  %v514 = vpop.permute.xlu0 %513
  %517 = vset.pattern.permute.xlu0 0
  %518 = vperm.xlu0 %517, %v505
  %v519 = vpop.permute.xlu0 %518
  %v522 = vsel %vm468, %v500, 0
  %v525 = vsel %vm468, %v501, 0
  %v528 = vsel %vm468, %v502, 0
  %530 = vmatpush.msra.mxu0 0.0
  %531 = vmatpush.msra.mxu0 0.0
  %532 = vmatpush.msra.mxu0 0.0
  %533 = vmatpush.msra.mxu0 0.0
  %534 = vmatpush.msra.mxu0 0.0
  %535 = vmatpush.msra.mxu0 0.0
  %536 = vmatpush.msra.mxu0 0.0
  %537 = vmatpush.msra.mxu0 0.0
  %538 = vmatpush.msra.mxu0 0.0
  %539 = vmatpush.msra.mxu0 0.0
  %540 = vmatpush.msra.mxu0 0.0
  %541 = vmatpush.msra.mxu0 0.0
  %542 = vmatpush.msra.mxu0 0.0
  %543 = vmatpush.msra.mxu0 0.0
  %544 = vmatpush.msra.mxu0 %v499
  %545 = vmatpush.msra.mxu0 %v498
  %546 = vmatmul.f32.gmra.mxu0 %v522
  %v547 = vpop.f32.mrf.mxu0
  %v548 = vadd.f32 %v509, %v547
  %549 = vmatmul.f32.gmra.mxu0 %v525
  %v550 = vpop.f32.mrf.mxu0
  %v551 = vadd.f32 %v514, %v550
  %552 = vmatmul.f32.gmra.mxu0 %v528
  %v553 = vpop.f32.mrf.mxu0
  %v554 = vadd.f32 %v519, %v553
  %555 = vdwg.mxu0
  %vm556 = vcmask 15360
  %557 = vst.msk [vmem:[%s4] sm:$0xff] %vm556, %v548
  %558 = vst.msk [vmem:[%s4 + $0x8] sm:$0xff] %vm556, %v551
  %vm559 = vcmask 11264
  %560 = vst.msk [vmem:[%s4 + $0x10] sm:$0xf] %vm559, %v554
  // Predicated region
  $region18: #{multisource_forward.1} parent=0 // pred_check
    _
  $region19: #{multisource_forward.1} parent=0 // pred_check_branch
    %562 = sbr.rel (0) target = $region21
  $region20: #{multisource_forward.1} parent=0 // pred_region
    _
  $region21: #{multisource_forward.1} parent=0 // pred_fallthru
    _
  // Predicated region
  $region22: #{multisource_forward.1} parent=0 // pred_check
    _
  $region23: #{multisource_forward.1} parent=0 // pred_check_branch
    %564 = sbr.rel (0) target = $region25
  $region24: #{multisource_forward.1} parent=0 // pred_region
    _
  $region25: #{multisource_forward.1} parent=0 // pred_fallthru
    _

</llo_original>
